<compile_context>
chip_gen: v7x
topology: tpu7x:2x2x1
jax: 0.10.0
libtpu: 0.0.40
codegen_flags: <defaults>
</compile_context>

<pallas_src>
import jax
import jax.numpy as jnp
from jax.experimental import pallas as pl
from jax.experimental.pallas import tpu as pltpu

LEAKY_SLOPE = 0.01   # torch.nn.LeakyReLU default negative_slope
HIDDEN = 128         # fc_head1 output width
NUM_CLASSES = 3      # fc_head2 output width
C_PAD = 128          # lane-dense padded output width


def _round_up(n, m):
    return ((n + m - 1) // m) * m


def _head_kernel(x_ref, w1_ref, b1_ref, w2_ref, b2_ref, o_ref):
    # x arrives f32 from HBM; cast to bf16 on the VPU (plenty of slack under MXU).
    x = x_ref[...].astype(jnp.bfloat16)
    # fc_head1: Linear(E, 128) on the MXU — bf16 operands, f32 accumulation.
    h = jnp.dot(x, w1_ref[...], preferred_element_type=jnp.float32)
    h = h + b1_ref[...]                                  # bias add in f32
    h = jnp.where(h > 0, h, LEAKY_SLOPE * h)             # LeakyReLU in f32
    # fc_head2: Linear(128, 3), zero-padded to 128 lane-dense output columns.
    out = jnp.dot(h.astype(jnp.bfloat16), w2_ref[...],
                  preferred_element_type=jnp.float32)
    o_ref[...] = (out + b2_ref[...]).astype(o_ref.dtype)  # bf16 store


def prepare_params(w1, b1, w2, b2):
    """One-time prep of kernel-ready parameter buffers (hoisted out of hot path).
    w1: [E, H], b1: [H], w2: [H, C], b2: [C] (stored [in, out] so kernel does x @ W)."""
    H = w1.shape[1]
    C = w2.shape[1]
    w1_bf = w1.astype(jnp.bfloat16)
    b1_2d = b1.reshape(1, H).astype(jnp.float32)
    w2_p = jnp.zeros((H, C_PAD), jnp.bfloat16).at[:, :C].set(w2.astype(jnp.bfloat16))
    b2_p = jnp.zeros((1, C_PAD), jnp.float32).at[:, :C].set(
        b2.reshape(1, C).astype(jnp.float32))
    return w1_bf, b1_2d, w2_p, b2_p


def _choose_tb(B, block_b):
    """Batch tile: multiple of 16, big enough to hide per-step overhead, small
    enough that large batches give >=2 'parallel' grid steps (v7x 2 TCs)."""
    block_b = max(16, (block_b // 16) * 16)
    cap = _round_up(max(pl.cdiv(B, 2), 8), 16)   # >= 2 steps when B is large
    return min(block_b, cap, _round_up(B, 8))    # never grossly exceed B


def action_classification_head(x, w1_bf, b1_2d, w2_p, b2_p, *, block_b=1024,
                               num_classes=NUM_CLASSES):
    """x: [B, E] f32; prepared params from prepare_params() -> [B, num_classes] f32."""
    B, E = x.shape
    H = w1_bf.shape[1]

    TB = _choose_tb(B, block_b)
    grid = (pl.cdiv(B, TB),)

    flops = 2 * B * E * H + 2 * B * H * C_PAD
    bytes_accessed = (B * E * x.dtype.itemsize            # x (f32 read)
                      + E * H * 2 + H * C_PAD * 2         # bf16 weights (resident)
                      + (H + C_PAD) * 4                   # f32 biases
                      + B * C_PAD * 2)                    # bf16 output write

    out_padded = pl.pallas_call(
        _head_kernel,
        out_shape=jax.ShapeDtypeStruct((B, C_PAD), jnp.bfloat16),
        grid_spec=pl.GridSpec(
            grid=grid,
            in_specs=[
                pl.BlockSpec((TB, E), lambda i: (i, 0)),       # x: tiled on batch
                pl.BlockSpec((E, H), lambda i: (0, 0)),        # w1: resident
                pl.BlockSpec((1, H), lambda i: (0, 0)),        # b1: resident
                pl.BlockSpec((H, C_PAD), lambda i: (0, 0)),    # w2 (padded): resident
                pl.BlockSpec((1, C_PAD), lambda i: (0, 0)),    # b2 (padded): resident
            ],
            out_specs=pl.BlockSpec((TB, C_PAD), lambda i: (i, 0)),
        ),
        compiler_params=pltpu.CompilerParams(
            dimension_semantics=("parallel",),   # batch steps independent
        ),
        cost_estimate=pl.CostEstimate(
            flops=flops, transcendentals=0, bytes_accessed=bytes_accessed),
    )(x, w1_bf, b1_2d, w2_p, b2_p)

    # Slice off the zero-padded logit columns; cast the tiny [B, 3] back to f32
    # to match the PyTorch module's output dtype.
    return out_padded[:, :num_classes].astype(jnp.float32)


def init_params(key, plm_embed_size, hidden=HIDDEN, num_classes=NUM_CLASSES):
    """Deterministic synthetic parameters, stored [in, out] (x @ W == torch x @ W.T)."""
    k1, k2, k3, k4 = jax.random.split(key, 4)
    w1 = jax.random.normal(k1, (plm_embed_size, hidden), jnp.float32) * 0.05
    b1 = jax.random.normal(k2, (hidden,), jnp.float32) * 0.05
    w2 = jax.random.normal(k3, (hidden, num_classes), jnp.float32) * 0.05
    b2 = jax.random.normal(k4, (num_classes,), jnp.float32) * 0.05
    return w1, b1, w2, b2


def _reference_f32(x, w1, b1, w2, b2):
    h = x @ w1 + b1[None, :]
    h = jnp.where(h > 0, h, LEAKY_SLOPE * h)
    return h @ w2 + b2[None, :]


def _reference_kernel_math(x, w1, b1, w2, b2):
    # Mirrors the kernel's bf16-operand / f32-accumulate / bf16-store path.
    h = jnp.dot(x.astype(jnp.bfloat16), w1.astype(jnp.bfloat16),
                preferred_element_type=jnp.float32) + b1[None, :]
    h = jnp.where(h > 0, h, LEAKY_SLOPE * h)
    out = jnp.dot(h.astype(jnp.bfloat16), w2.astype(jnp.bfloat16),
                  preferred_element_type=jnp.float32) + b2[None, :]
    return out.astype(jnp.bfloat16).astype(jnp.float32)


if __name__ == "__main__":
    PLM_EMBED = 32   # plm_embed_size

    key = jax.random.PRNGKey(0)
    kx, kp = jax.random.split(key)
    w1, b1, w2, b2 = init_params(kp, PLM_EMBED)
    w1_bf, b1_2d, w2_p, b2_p = prepare_params(w1, b1, w2, b2)   # hoisted, once

    # Case 1: small batch, single grid step, block exactly matches batch.
    B = 8
    x = jax.random.normal(kx, (B, PLM_EMBED), jnp.float32)
    logits = action_classification_head(x, w1_bf, b1_2d, w2_p, b2_p)
    jax.block_until_ready(logits)
    assert logits.shape == (B, NUM_CLASSES)
    assert jnp.allclose(logits, _reference_kernel_math(x, w1, b1, w2, b2),
                        atol=4e-3, rtol=4e-3), "mismatch vs bf16-math reference"
    assert jnp.allclose(logits, _reference_f32(x, w1, b1, w2, b2),
                        atol=3e-2, rtol=3e-2), "mismatch vs f32 reference"

    # Case 2: ragged batch, multi-step grid (exercises cdiv grid + masked last block).
    B2 = 37
    x2 = jax.random.normal(jax.random.fold_in(kx, 1), (B2, PLM_EMBED), jnp.float32)
    logits2 = action_classification_head(x2, w1_bf, b1_2d, w2_p, b2_p, block_b=16)
    jax.block_until_ready(logits2)
    assert logits2.shape == (B2, NUM_CLASSES)
    assert jnp.allclose(logits2, _reference_kernel_math(x2, w1, b1, w2, b2),
                        atol=4e-3, rtol=4e-3), "mismatch vs bf16-math reference (tiled)"
    assert jnp.allclose(logits2, _reference_f32(x2, w1, b1, w2, b2),
                        atol=3e-2, rtol=3e-2), "mismatch vs f32 reference (tiled)"

    print("KERNEL_OK")
</pallas_src>

<mosaic_0001>
module attributes {stable_mosaic.version = 11 : i64} {
  func.func @_head_kernel(%arg0: i32, %arg1: memref<8x32xf32, #tpu.memory_space<vmem>>, %arg2: memref<32x128xbf16, #tpu.memory_space<vmem>>, %arg3: memref<1x128xf32, #tpu.memory_space<vmem>>, %arg4: memref<128x128xbf16, #tpu.memory_space<vmem>>, %arg5: memref<1x128xf32, #tpu.memory_space<vmem>>, %arg6: memref<8x128xbf16, #tpu.memory_space<vmem>>) attributes {dimension_semantics = [#tpu.dimension_semantics<parallel>], iteration_bounds = array<i64: 1>, scalar_prefetch = 0 : i64, scratch_operands = 0 : i64, tpu.core_type = #tpu.core_type<tc>, window_params = [{transform_indices = @transform_0, window_bounds = array<i64: 8, 32>}, {pipeline_mode = #tpu.pipeline_mode<synchronous>, transform_indices = @transform_1, window_bounds = array<i64: 32, 128>}, {pipeline_mode = #tpu.pipeline_mode<synchronous>, transform_indices = @transform_2, window_bounds = array<i64: 1, 128>}, {pipeline_mode = #tpu.pipeline_mode<synchronous>, transform_indices = @transform_3, window_bounds = array<i64: 128, 128>}, {pipeline_mode = #tpu.pipeline_mode<synchronous>, transform_indices = @transform_4, window_bounds = array<i64: 1, 128>}, {transform_indices = @transform_5, window_bounds = array<i64: 8, 128>}]} {
    %c0 = arith.constant 0 : index
    %c0_0 = arith.constant 0 : index
    %0 = vector.load %arg1[%c0, %c0_0] : memref<8x32xf32, #tpu.memory_space<vmem>>, vector<8x32xf32>
    %1 = arith.truncf %0 : vector<8x32xf32> to vector<8x32xbf16>
    %c0_1 = arith.constant 0 : index
    %c0_2 = arith.constant 0 : index
    %2 = vector.load %arg2[%c0_1, %c0_2] : memref<32x128xbf16, #tpu.memory_space<vmem>>, vector<32x128xbf16>
    %cst = arith.constant dense<0.000000e+00> : vector<8x128xf32>
    %3 = tpu.matmul %1, %2, %cst {dimension_numbers = #tpu.dot_dimension_numbers<[1], [0], [0], [1], [0, 0, 1, 1], [], []>} : vector<8x32xbf16>, vector<32x128xbf16>, vector<8x128xf32> -> vector<8x128xf32>
    %c0_3 = arith.constant 0 : index
    %c0_4 = arith.constant 0 : index
    %4 = vector.load %arg3[%c0_3, %c0_4] : memref<1x128xf32, #tpu.memory_space<vmem>>, vector<1x128xf32>
    %5 = vector.broadcast %4 : vector<1x128xf32> to vector<8x128xf32>
    %6 = arith.addf %3, %5 : vector<8x128xf32>
    %cst_5 = arith.constant 0.000000e+00 : f32
    %7 = vector.broadcast %cst_5 : f32 to vector<8x128xf32>
    %8 = arith.cmpf ogt, %6, %7 : vector<8x128xf32>
    %cst_6 = arith.constant 0.00999999977 : f32
    %9 = vector.broadcast %cst_6 : f32 to vector<8x128xf32>
    %10 = arith.mulf %9, %6 : vector<8x128xf32>
    %11 = arith.select %8, %6, %10 : vector<8x128xi1>, vector<8x128xf32>
    %12 = arith.truncf %11 : vector<8x128xf32> to vector<8x128xbf16>
    %c0_7 = arith.constant 0 : index
    %c0_8 = arith.constant 0 : index
    %13 = vector.load %arg4[%c0_7, %c0_8] : memref<128x128xbf16, #tpu.memory_space<vmem>>, vector<128x128xbf16>
    %cst_9 = arith.constant dense<0.000000e+00> : vector<8x128xf32>
    %14 = tpu.matmul %12, %13, %cst_9 {dimension_numbers = #tpu.dot_dimension_numbers<[1], [0], [0], [1], [0, 0, 1, 1], [], []>} : vector<8x128xbf16>, vector<128x128xbf16>, vector<8x128xf32> -> vector<8x128xf32>
    %c0_10 = arith.constant 0 : index
    %c0_11 = arith.constant 0 : index
    %15 = vector.load %arg5[%c0_10, %c0_11] : memref<1x128xf32, #tpu.memory_space<vmem>>, vector<1x128xf32>
    %16 = vector.broadcast %15 : vector<1x128xf32> to vector<8x128xf32>
    %17 = arith.addf %14, %16 : vector<8x128xf32>
    %18 = arith.truncf %17 : vector<8x128xf32> to vector<8x128xbf16>
    %c0_12 = arith.constant 0 : index
    %c0_13 = arith.constant 0 : index
    %19 = vector.load %arg6[%c0_12, %c0_13] : memref<8x128xbf16, #tpu.memory_space<vmem>>, vector<8x128xbf16>
    tpu.vector_store %arg6[%c0_12, %c0_13], %18 {strides = array<i32>} : memref<8x128xbf16, #tpu.memory_space<vmem>>, vector<8x128xbf16>,
    return
  }
  func.func @transform_0(%arg0: i32) -> (i32, i32) {
    %c0_i32 = arith.constant 0 : i32
    %c0_i32_0 = arith.constant 0 : i32
    return %arg0, %c0_i32 : i32, i32
  }
  func.func @transform_1(%arg0: i32) -> (i32, i32) {
    %c0_i32 = arith.constant 0 : i32
    %c0_i32_0 = arith.constant 0 : i32
    %c0_i32_1 = arith.constant 0 : i32
    return %c0_i32, %c0_i32_0 : i32, i32
  }
  func.func @transform_2(%arg0: i32) -> (i32, i32) {
    %c0_i32 = arith.constant 0 : i32
    %c0_i32_0 = arith.constant 0 : i32
    %c0_i32_1 = arith.constant 0 : i32
    return %c0_i32, %c0_i32_0 : i32, i32
  }
  func.func @transform_3(%arg0: i32) -> (i32, i32) {
    %c0_i32 = arith.constant 0 : i32
    %c0_i32_0 = arith.constant 0 : i32
    %c0_i32_1 = arith.constant 0 : i32
    return %c0_i32, %c0_i32_0 : i32, i32
  }
  func.func @transform_4(%arg0: i32) -> (i32, i32) {
    %c0_i32 = arith.constant 0 : i32
    %c0_i32_0 = arith.constant 0 : i32
    %c0_i32_1 = arith.constant 0 : i32
    return %c0_i32, %c0_i32_0 : i32, i32
  }
  func.func @transform_5(%arg0: i32) -> (i32, i32) {
    %c0_i32 = arith.constant 0 : i32
    %c0_i32_0 = arith.constant 0 : i32
    return %arg0, %c0_i32 : i32, i32
  }
}

</mosaic_0001>

<llo_original>
// kernel: tpu_custom_call.1
$region0: #{tpu_custom_call.1}
  #allocation0 [shape = 'u32[]', space=smem, size = 0x4, offset = 0x4, fixed_abs, tag = 'smem constant byte address 0x4 - core index']
  #allocation1 [shape = 'u32[144,128]{1,0:T(1,128)}', space=vmem, size = 0x12000, scoped, tag = 'internal scratch']
  %s0 = inlined_call_operand.hbm [shape: f32[8,32], index: 0, kind: input, shape index: {}]
  %s1 = inlined_call_operand.hbm [shape: bf16[32,128], index: 1, kind: input, shape index: {}]
  %s2 = inlined_call_operand.vmem [shape: f32[1,128], index: 2, kind: input, shape index: {}]
  %s3 = inlined_call_operand.hbm [shape: bf16[128,128], index: 3, kind: input, shape index: {}]
  %s4 = inlined_call_operand.vmem [shape: f32[1,128], index: 4, kind: input, shape index: {}]
  %s5 = inlined_call_operand.hbm [shape: bf16[8,128], index: 5, kind: output, shape index: {}]
  %s6 = sld [smem:[#allocation0]]
  $region42: #{tpu_custom_call.1} parent=0
    _
  %s8 = ssub.s32 1, %s6
  %s9 = scalar_select 0, %s8, %s6
  $region1: #{tpu_custom_call.1} parent=0
    #allocation2 [shape = 'u8[4096]{0}', space=vmem, size = 0x1000, scoped, tag = 'input window, operand 0, single buffered']
    #allocation3 [shape = 's32[1]{0}', space=sflag, size = 0x4, scoped, tag = 'scoped memory for tpu_custom_call.1']
    #allocation4 [shape = 's32[1]{0}', space=sflag, size = 0x4, scoped, tag = 'scoped memory for tpu_custom_call.1']
    #allocation5 [shape = 'u8[8192]{0}', space=vmem, size = 0x2000, scoped, tag = 'input window, operand 1, single buffered']
    #allocation6 [shape = 's32[1]{0}', space=sflag, size = 0x4, scoped, tag = 'scoped memory for tpu_custom_call.1']
    #allocation7 [shape = 'u8[32768]{0}', space=vmem, size = 0x8000, scoped, tag = 'input window, operand 3, single buffered']
    #allocation8 [shape = 'u8[2048]{0}', space=vmem, size = 0x800, scoped, tag = 'output window, operand 0, single buffered']
    %10 = vsyncpa [#allocation3], 0
    %11 = vsyncpa [#allocation6], 0
    %12 = vsyncpa [#allocation4], 0
    // Predicated region
    $region2: #{tpu_custom_call.1} parent=1 // pred_check
      _
    $region3: #{tpu_custom_call.1} parent=1 // pred_check_branch
      %14 = sbr.rel (0) target = $region5
    $region4: #{tpu_custom_call.1} parent=1 // pred_region
      %s16 = ssub.s32 128, 128
      %17 = vsyncadd [#allocation3], %s16
      %s19 = sshll.u32 [#allocation2], 4
      %s20 = int_to_ptr.vmem [resolvable:$true] %s19
      %22 = dma.hbm_to_vmem [thread:$0]  %s0, 128, %s20, [#allocation3]
    $region5: #{tpu_custom_call.1} parent=1 // pred_fallthru
      _
    // Predicated region
    $region6: #{tpu_custom_call.1} parent=1 // pred_check
      _
    $region7: #{tpu_custom_call.1} parent=1 // pred_check_branch
      %24 = sbr.rel (0) target = $region9
    $region8: #{tpu_custom_call.1} parent=1 // pred_region
      %s26 = ssub.s32 256, 256
      %27 = vsyncadd [#allocation6], %s26
      %s28 = sshll.u32 [#allocation5], 4
      %s29 = int_to_ptr.vmem [resolvable:$true] %s28
      %34 = dma.hbm_to_vmem [thread:$0]  %s1, 256, %s29, [#allocation6], 64, 64, 4
    $region9: #{tpu_custom_call.1} parent=1 // pred_fallthru
      _
    // Predicated region
    $region10: #{tpu_custom_call.1} parent=1 // pred_check
      _
    $region11: #{tpu_custom_call.1} parent=1 // pred_check_branch
      %36 = sbr.rel (0) target = $region13
    $region12: #{tpu_custom_call.1} parent=1 // pred_region
      _
    $region13: #{tpu_custom_call.1} parent=1 // pred_fallthru
      _
    // Predicated region
    $region14: #{tpu_custom_call.1} parent=1 // pred_check
      _
    $region15: #{tpu_custom_call.1} parent=1 // pred_check_branch
      %38 = sbr.rel (0) target = $region17
    $region16: #{tpu_custom_call.1} parent=1 // pred_region
      %s40 = ssub.s32 1024, 1024
      %41 = vsyncadd [#allocation6], %s40
      %s42 = sshll.u32 [#allocation7], 4
      %s43 = int_to_ptr.vmem [resolvable:$true] %s42
      %48 = dma.hbm_to_vmem [thread:$0]  %s3, 1024, %s43, [#allocation6], 64, 64, 4
    $region17: #{tpu_custom_call.1} parent=1 // pred_fallthru
      _
    // Predicated region
    $region18: #{tpu_custom_call.1} parent=1 // pred_check
      _
    $region19: #{tpu_custom_call.1} parent=1 // pred_check_branch
      %50 = sbr.rel (0) target = $region21
    $region20: #{tpu_custom_call.1} parent=1 // pred_region
      _
    $region21: #{tpu_custom_call.1} parent=1 // pred_fallthru
      _
    // Predicated region
    $region22: #{tpu_custom_call.1} parent=1 // pred_check
      _
    $region23: #{tpu_custom_call.1} parent=1 // pred_check_branch
      %52 = sbr.rel (0) target = $region25
    $region24: #{tpu_custom_call.1} parent=1 // pred_region
      %53 = dma.done [#allocation3], 128
    $region25: #{tpu_custom_call.1} parent=1 // pred_fallthru
      _
    // Predicated region
    $region26: #{tpu_custom_call.1} parent=1 // pred_check
      _
    $region27: #{tpu_custom_call.1} parent=1 // pred_check_branch
      %55 = sbr.rel (0) target = $region29
    $region28: #{tpu_custom_call.1} parent=1 // pred_region
      %56 = dma.done [#allocation6], 256
    $region29: #{tpu_custom_call.1} parent=1 // pred_fallthru
      _
    // Predicated region
    $region30: #{tpu_custom_call.1} parent=1 // pred_check
      _
    $region31: #{tpu_custom_call.1} parent=1 // pred_check_branch
      %58 = sbr.rel (0) target = $region33
    $region32: #{tpu_custom_call.1} parent=1 // pred_region
      %59 = dma.done [#allocation6], 1024
    $region33: #{tpu_custom_call.1} parent=1 // pred_fallthru
      _
    %v61 = vld [vmem:[#allocation2] sm:$0xff]
    %v62 = vpack.c.bf16 %v61, %v61
    %v63 = vld [vmem:[#allocation5] sm:$0xf]
    %v64 = vld [vmem:[#allocation5 + $0x4] sm:$0xf]
    %v65 = vld [vmem:[#allocation5 + $0x8] sm:$0xf]
    %v66 = vld [vmem:[#allocation5 + $0xc] sm:$0xf]
    %v67 = vld [vmem:[%s2] sm:$0x1]
    %v69 = vlaneseq
    %v70 = vshrl.u32 %v69, 7
    %v71 = vsub.s32 0, %v70
    %v72 = vrot.slane %v67, %v71
    %v78 = vunpack.c.l.b16 %v63
    %v79 = vunpack.c.l.b16 %v64
    %v80 = vunpack.c.l.b16 %v65
    %v81 = vunpack.c.l.b16 %v66
    %v82 = vpack.c.b16 %v79, %v78
    %v83 = vpack.c.b16 %v81, %v80
    %vm86 = vcmask 261120
    %v88 = vsel %vm86, %v62, 0
    %90 = vmatprep.subr.bf16.mxu0 0
    %91 = vmatpush1.bf16.msra.mxu0 %v82
    %92 = vmatprep.subr.bf16.mxu0 0
    %93 = vmatpush1.bf16.msra.mxu0 %v83
    %94 = vmatprep.subr.bf16.mxu0 0
    %95 = vmatpush1.bf16.msra.mxu0 0
    %96 = vmatprep.subr.bf16.mxu0 0
    %97 = vmatpush1.bf16.msra.mxu0 0
    %98 = vmatprep.subr.bf16.mxu0 0
    %99 = vmatpush1.bf16.msra.mxu0 0
    %100 = vmatprep.subr.bf16.mxu0 0
    %101 = vmatpush1.bf16.msra.mxu0 0
    %102 = vmatprep.subr.bf16.mxu0 0
    %103 = vmatpush1.bf16.msra.mxu0 0
    %104 = vmatprep.subr.bf16.mxu0 0
    %105 = vmatpush1.bf16.msra.mxu0 0
    %106 = vmatprep.subr.bf16.mxu0 0
    %107 = vmatpush1.bf16.msra.mxu0 0
    %108 = vmatprep.subr.bf16.mxu0 0
    %109 = vmatpush1.bf16.msra.mxu0 0
    %110 = vmatprep.subr.bf16.mxu0 0
    %111 = vmatpush1.bf16.msra.mxu0 0
    %112 = vmatprep.subr.bf16.mxu0 0
    %113 = vmatpush1.bf16.msra.mxu0 0
    %114 = vmatprep.subr.bf16.mxu0 0
    %115 = vmatpush1.bf16.msra.mxu0 0
    %116 = vmatprep.subr.bf16.mxu0 0
    %117 = vmatpush1.bf16.msra.mxu0 0
    %118 = vmatprep.subr.bf16.mxu0 0
    %119 = vmatpush1.bf16.msra.mxu0 0
    %120 = vmatprep.subr.bf16.mxu0 0
    %121 = vmatpush1.bf16.msra.mxu0 0
    %122 = vmatprep.mubr.bf16.mxu0 0
    %123 = vmatmul.mubr.bf16.gmra.mrb[0].mxu0 %v88
    %v124 = vpop.f32.mrb[0].mxu0
    %v125 = vadd.f32 %v72, %v124
    %v126 = vpop.f32.mrb[0].mxu0
    %v127 = vpop.f32.mrb[0].mxu0
    %v128 = vpop.f32.mrb[0].mxu0
    %129 = vdwg.mxu0
    %vm130 = vcmp.gt.f32.partialorder %v125, 0.0
    %v131 = vmul.f32 %v125, 0.01
    %v132 = vsel %vm130, %v125, %v131
    %v133 = vpack.c.bf16 %v132, %v132
    %v134 = vld [vmem:[#allocation7] sm:$0xf]
    %v135 = vld [vmem:[#allocation7 + $0x4] sm:$0xf]
    %v136 = vld [vmem:[#allocation7 + $0x8] sm:$0xf]
    %v137 = vld [vmem:[#allocation7 + $0xc] sm:$0xf]
    %v138 = vld [vmem:[#allocation7 + $0x10] sm:$0xf]
    %v139 = vld [vmem:[#allocation7 + $0x14] sm:$0xf]
    %v140 = vld [vmem:[#allocation7 + $0x18] sm:$0xf]
    %v141 = vld [vmem:[#allocation7 + $0x1c] sm:$0xf]
    %v142 = vld [vmem:[#allocation7 + $0x20] sm:$0xf]
    %v143 = vld [vmem:[#allocation7 + $0x24] sm:$0xf]
    %v144 = vld [vmem:[#allocation7 + $0x28] sm:$0xf]
    %v145 = vld [vmem:[#allocation7 + $0x2c] sm:$0xf]
    %v146 = vld [vmem:[#allocation7 + $0x30] sm:$0xf]
    %v147 = vld [vmem:[#allocation7 + $0x34] sm:$0xf]
    %v148 = vld [vmem:[#allocation7 + $0x38] sm:$0xf]
    %v149 = vld [vmem:[#allocation7 + $0x3c] sm:$0xf]
    %v150 = vld [vmem:[%s4] sm:$0x1]
    %v152 = vlaneseq
    %v153 = vshrl.u32 %v152, 7
    %v154 = vsub.s32 0, %v153
    %v155 = vrot.slane %v150, %v154
    %v173 = vunpack.c.l.b16 %v134
    %v174 = vunpack.c.l.b16 %v135
    %v175 = vunpack.c.l.b16 %v136
    %v176 = vunpack.c.l.b16 %v137
    %v177 = vunpack.c.l.b16 %v138
    %v178 = vunpack.c.l.b16 %v139
    %v179 = vunpack.c.l.b16 %v140
    %v180 = vunpack.c.l.b16 %v141
    %v181 = vunpack.c.l.b16 %v142
    %v182 = vunpack.c.l.b16 %v143
    %v183 = vunpack.c.l.b16 %v144
    %v184 = vunpack.c.l.b16 %v145
    %v185 = vunpack.c.l.b16 %v146
    %v186 = vunpack.c.l.b16 %v147
    %v187 = vunpack.c.l.b16 %v148
    %v188 = vunpack.c.l.b16 %v149
    %v189 = vpack.c.b16 %v174, %v173
    %v190 = vpack.c.b16 %v176, %v175
    %v191 = vpack.c.b16 %v178, %v177
    %v192 = vpack.c.b16 %v180, %v179
    %v193 = vpack.c.b16 %v182, %v181
    %v194 = vpack.c.b16 %v184, %v183
    %v195 = vpack.c.b16 %v186, %v185
    %v196 = vpack.c.b16 %v188, %v187
    %205 = vmatprep.subr.bf16.mxu0 0
    %206 = vmatpush1.bf16.msra.mxu0 %v189
    %207 = vmatprep.subr.bf16.mxu0 0
    %208 = vmatpush1.bf16.msra.mxu0 %v190
    %209 = vmatprep.subr.bf16.mxu0 0
    %210 = vmatpush1.bf16.msra.mxu0 %v191
    %211 = vmatprep.subr.bf16.mxu0 0
    %212 = vmatpush1.bf16.msra.mxu0 %v192
    %213 = vmatprep.subr.bf16.mxu0 0
    %214 = vmatpush1.bf16.msra.mxu0 %v193
    %215 = vmatprep.subr.bf16.mxu0 0
    %216 = vmatpush1.bf16.msra.mxu0 %v194
    %217 = vmatprep.subr.bf16.mxu0 0
    %218 = vmatpush1.bf16.msra.mxu0 %v195
    %219 = vmatprep.subr.bf16.mxu0 0
    %220 = vmatpush1.bf16.msra.mxu0 %v196
    %221 = vmatprep.subr.bf16.mxu0 0
    %222 = vmatpush1.bf16.msra.mxu0 0
    %223 = vmatprep.subr.bf16.mxu0 0
    %224 = vmatpush1.bf16.msra.mxu0 0
    %225 = vmatprep.subr.bf16.mxu0 0
    %226 = vmatpush1.bf16.msra.mxu0 0
    %227 = vmatprep.subr.bf16.mxu0 0
    %228 = vmatpush1.bf16.msra.mxu0 0
    %229 = vmatprep.subr.bf16.mxu0 0
    %230 = vmatpush1.bf16.msra.mxu0 0
    %231 = vmatprep.subr.bf16.mxu0 0
    %232 = vmatpush1.bf16.msra.mxu0 0
    %233 = vmatprep.subr.bf16.mxu0 0
    %234 = vmatpush1.bf16.msra.mxu0 0
    %235 = vmatprep.subr.bf16.mxu0 0
    %236 = vmatpush1.bf16.msra.mxu0 0
    %237 = vmatprep.mubr.bf16.mxu0 0
    %238 = vmatmul.mubr.bf16.gmra.mrb[0].mxu0 %v133
    %v239 = vpop.f32.mrb[0].mxu0
    %v240 = vadd.f32 %v155, %v239
    %v241 = vpop.f32.mrb[0].mxu0
    %v242 = vpop.f32.mrb[0].mxu0
    %v243 = vpop.f32.mrb[0].mxu0
    %244 = vdwg.mxu0
    %v245 = vpack.c.bf16 %v240, %v240
    %246 = vst [vmem:[#allocation8] sm:$0xf] %v245
    // Predicated region
    $region34: #{tpu_custom_call.1} parent=1 // pred_check
      _
    $region35: #{tpu_custom_call.1} parent=1 // pred_check_branch
      %248 = sbr.rel (0) target = $region37
    $region36: #{tpu_custom_call.1} parent=1 // pred_region
      %s250 = ssub.s32 64, 64
      %251 = vsyncadd [#allocation4], %s250
      %s253 = sshll.u32 [#allocation8], 4
      %s254 = int_to_ptr.vmem [resolvable:$true] %s253
      %256 = dma.vmem_to_hbm [thread:$0]  %s254, 64, %s5, [#allocation4]
    $region37: #{tpu_custom_call.1} parent=1 // pred_fallthru
      _
    // Predicated region
    $region38: #{tpu_custom_call.1} parent=1 // pred_check
      _
    $region39: #{tpu_custom_call.1} parent=1 // pred_check_branch
      %258 = sbr.rel (0) target = $region41
    $region40: #{tpu_custom_call.1} parent=1 // pred_region
      %259 = dma.done [#allocation4], 64
    $region41: #{tpu_custom_call.1} parent=1 // pred_fallthru
      _
    %260 = vsyncpa [#allocation3], 1
    %261 = vsyncpa [#allocation6], 1
    %262 = vsyncpa [#allocation4], 1

</llo_original>
